<compile_context>
chip_gen: v6e
topology: v6e:2x2x1
jax: 0.10.0
libtpu: 0.0.40
codegen_flags: <defaults>
</compile_context>

<pallas_src>
import functools
import math

import jax
import jax.numpy as jnp
from jax.experimental import pallas as pl
from jax.experimental.pallas import tpu as pltpu


# ----------------------------------------------------------------------------
# Kernels
# ----------------------------------------------------------------------------
def _matmul_bias_kernel(x_ref, w_ref, b_ref, o_ref, acc_ref):
    """out = x @ w + b, tiled over (M, N, K); bias folded into k==0 init."""
    k = pl.program_id(2)

    @pl.when(k == 0)
    def _init():
        acc_ref[...] = jnp.broadcast_to(b_ref[...], acc_ref.shape)

    acc_ref[...] += jnp.dot(x_ref[...], w_ref[...],
                            preferred_element_type=jnp.float32)

    @pl.when(k == pl.num_programs(2) - 1)
    def _finalize():
        o_ref[...] = acc_ref[...].astype(o_ref.dtype)


def _lora_linear_kernel(x_ref, w_ref, b_ref, down_ref, wu_ref, o_ref,
                        acc_ref, *, rank):
    """out = x @ w + b + down @ wu.

    `down` = gain * (x @ W_down) is precomputed outside the kernel (f32,
    (M, r) with r<=4).  The rank-r up-projection is applied as `rank`
    broadcast-FMAs on the VPU in the finalize branch only, keeping the MXU
    hot loop a single clean matmul.
    """
    k = pl.program_id(2)

    @pl.when(k == 0)
    def _init():
        acc_ref[...] = jnp.broadcast_to(b_ref[...], acc_ref.shape)

    acc_ref[...] += jnp.dot(x_ref[...], w_ref[...],
                            preferred_element_type=jnp.float32)

    @pl.when(k == pl.num_programs(2) - 1)
    def _finalize():
        acc = acc_ref[...]                       # (tm, tn) f32 (bias included)
        down = down_ref[...]                     # (tm, r)  f32 (gain included)
        wu = wu_ref[...]                         # (r, tn)  f32
        for j in range(rank):                    # tiny static unroll -> VPU
            acc = acc + down[:, j:j + 1] * wu[j:j + 1, :]
        o_ref[...] = acc.astype(o_ref.dtype)


# ----------------------------------------------------------------------------
# Weight preparation (run ONCE at weight-load time)
# ----------------------------------------------------------------------------
def _round_up(a, b):
    return (a + b - 1) // b * b


def _pick_tile(padded, candidates):
    for c in candidates:
        if padded % c == 0:
            return c
    return padded


def prepare_lora_linear(w_orig, b_orig, w_down, w_up, multiplier, scale, *,
                        merge_lora=False, compute_dtype=jnp.bfloat16):
    """One-time weight prep: dtype cast, optional LoRA merge, tile padding.

    Weights are stored transposed vs. PyTorch ([in, out]) so the hot path is a
    plain row-major matmul on the MXU.  Do NOT re-run this per forward step.
    """
    K, N = w_orig.shape
    r = w_down.shape[1]
    gain = float(multiplier) * float(scale)
    cdt = jnp.dtype(compute_dtype) if compute_dtype is not None else jnp.dtype(w_orig.dtype)

    # Padded K / N extents so tk never collapses to 128 for large K and tn is
    # a multiple of 256 on the 256-wide-MXU chips (zero padding is exact).
    K_pad = _round_up(K, 128)
    if K_pad > 512:
        K_pad = _round_up(K_pad, 512)
    tk = min(K_pad, 512)
    N_pad = _round_up(N, 128)
    if N_pad > 256:
        N_pad = _round_up(N_pad, 256)
    tn = _pick_tile(N_pad, (512, 256, 128))

    if b_orig is None:
        b_orig = jnp.zeros((N,), jnp.float32)
    b_p = b_orig.astype(jnp.float32)
    if N_pad != N:
        b_p = jnp.pad(b_p, (0, N_pad - N))
    b_p = b_p.reshape(1, N_pad)

    if merge_lora:
        # Fold gain * (W_down @ W_up) into the base weight in f32, cast once.
        #   x @ (W + g*Wd@Wu) + b == x@W + g*(x@Wd)@Wu + b
        w_c = (w_orig.astype(jnp.float32)
               + gain * jnp.dot(w_down.astype(jnp.float32),
                                w_up.astype(jnp.float32))).astype(cdt)
        wd_f = None
        wu_p = None
    else:
        w_c = w_orig.astype(cdt)
        wd_f = w_down.astype(jnp.float32)        # tiny (K, r), kept in f32
        wu_p = w_up.astype(jnp.float32)          # tiny (r, N), kept in f32
        if N_pad != N:
            wu_p = jnp.pad(wu_p, ((0, 0), (0, N_pad - N)))

    w_p = w_c
    if K_pad != K or N_pad != N:
        w_p = jnp.pad(w_c, ((0, K_pad - K), (0, N_pad - N)))

    return dict(K=K, N=N, r=r, gain=gain, cdt=cdt, merge_lora=merge_lora,
                K_pad=K_pad, N_pad=N_pad, tk=tk, tn=tn,
                w=w_p, b=b_p, w_down=wd_f, w_up=wu_p)


# ----------------------------------------------------------------------------
# Forward
# ----------------------------------------------------------------------------
def lora_linear_forward(x, params, *, tm=1024):
    """LoRA-wrapped Linear forward.  x: [..., K] -> [..., N]."""
    K, N = params["K"], params["N"]
    K_pad, N_pad = params["K_pad"], params["N_pad"]
    tk, tn = params["tk"], params["tn"]
    cdt = params["cdt"]
    r = params["r"]
    merge_lora = params["merge_lora"]

    lead_shape = x.shape[:-1]
    out_dtype = x.dtype
    x2 = x.reshape(-1, K)
    M = x2.shape[0]

    sublane = 8 if jnp.dtype(cdt).itemsize >= 4 else 16
    tm = max(sublane, min(int(tm), _round_up(M, sublane)))
    tm = _round_up(tm, sublane)
    M_pad = _round_up(M, tm)

    # v7x has 2 TensorCores: make sure the parallel (i, j) grid has >= 2
    # programs when the shapes allow it, so both cores get work.
    if (M_pad // tm) * (N_pad // tn) < 2:
        if tn >= 256:
            tn //= 2
        elif tm > sublane:
            tm = _round_up(max(tm // 2, sublane), sublane)
            M_pad = _round_up(M, tm)

    x_c = x2.astype(cdt)
    if M_pad != M or K_pad != K:
        x_c = jnp.pad(x_c, ((0, M_pad - M), (0, K_pad - K)))

    grid = (M_pad // tm, N_pad // tn, K_pad // tk)

    c_isize = jnp.dtype(cdt).itemsize
    out_isize = jnp.dtype(out_dtype).itemsize
    # Double-buffered in/out tiles + persistent f32 accumulator + small extras.
    vmem_est = (2 * tm * tk * c_isize + 2 * tk * tn * c_isize
                + 2 * tm * tn * out_isize + tm * tn * 4
                + 2 * tn * 4 + 2 * tm * r * 4 + 2 * r * tn * 4)
    cparams = pltpu.CompilerParams(
        dimension_semantics=("parallel", "parallel", "arbitrary"),
        vmem_limit_bytes=int(min(64 << 20, max(32 << 20, 2 * vmem_est))))

    out_bytes = M_pad * N_pad * out_isize

    if merge_lora:
        cost = pl.CostEstimate(
            flops=int(2 * M_pad * K_pad * N_pad),
            transcendentals=0,
            bytes_accessed=int(x_c.size * c_isize + params["w"].size * c_isize
                               + params["b"].size * 4 + out_bytes))
        out_p = pl.pallas_call(
            _matmul_bias_kernel,
            out_shape=jax.ShapeDtypeStruct((M_pad, N_pad), out_dtype),
            grid_spec=pltpu.PrefetchScalarGridSpec(
                num_scalar_prefetch=0,
                grid=grid,
                in_specs=[
                    pl.BlockSpec((tm, tk), lambda i, j, k: (i, k)),   # x tile
                    pl.BlockSpec((tk, tn), lambda i, j, k: (k, j)),   # W tile
                    pl.BlockSpec((1, tn), lambda i, j, k: (0, j)),    # bias tile
                ],
                out_specs=pl.BlockSpec((tm, tn), lambda i, j, k: (i, j)),
                scratch_shapes=[pltpu.VMEM((tm, tn), jnp.float32)],
            ),
            compiler_params=cparams,
            cost_estimate=cost,
        )(x_c, params["w"], params["b"])
    else:
        # Hoisted LoRA down-projection: tiny (M, r) f32 matmul, gain applied
        # in f32 (no bf16 rounding of the LoRA delta), computed exactly once.
        down = params["gain"] * jnp.dot(x2.astype(jnp.float32),
                                        params["w_down"],
                                        preferred_element_type=jnp.float32)
        if M_pad != M:
            down = jnp.pad(down, ((0, M_pad - M), (0, 0)))

        cost = pl.CostEstimate(
            flops=int(2 * M_pad * K_pad * N_pad + 2 * M_pad * r * N_pad),
            transcendentals=0,
            bytes_accessed=int(x_c.size * c_isize + params["w"].size * c_isize
                               + params["b"].size * 4 + down.size * 4
                               + params["w_up"].size * 4 + out_bytes))
        out_p = pl.pallas_call(
            functools.partial(_lora_linear_kernel, rank=r),
            out_shape=jax.ShapeDtypeStruct((M_pad, N_pad), out_dtype),
            grid_spec=pltpu.PrefetchScalarGridSpec(
                num_scalar_prefetch=0,
                grid=grid,
                in_specs=[
                    pl.BlockSpec((tm, tk), lambda i, j, k: (i, k)),   # x tile
                    pl.BlockSpec((tk, tn), lambda i, j, k: (k, j)),   # W tile
                    pl.BlockSpec((1, tn), lambda i, j, k: (0, j)),    # bias tile
                    pl.BlockSpec((tm, r), lambda i, j, k: (i, 0)),    # down tile
                    pl.BlockSpec((r, tn), lambda i, j, k: (0, j)),    # W_up tile
                ],
                out_specs=pl.BlockSpec((tm, tn), lambda i, j, k: (i, j)),
                scratch_shapes=[pltpu.VMEM((tm, tn), jnp.float32)],
            ),
            compiler_params=cparams,
            cost_estimate=cost,
        )(x_c, params["w"], params["b"], down, params["w_up"])

    out2 = out_p[:M, :N]
    return out2.reshape(*lead_shape, N)


# ----------------------------------------------------------------------------
# Reference + self-test
# ----------------------------------------------------------------------------
def _reference(x, w_orig, b_orig, w_down, w_up, multiplier, scale):
    base = jnp.einsum("...k,kn->...n", x, w_orig) + b_orig
    lora = jnp.einsum("...r,rn->...n",
                      jnp.einsum("...k,kr->...r", x, w_down), w_up)
    return base + lora * (multiplier * scale)


if __name__ == "__main__":
    # Module hyper-params (LoRAModule defaults): lora_dim=4, alpha=1, multiplier=1.0
    lora_dim = 4
    alpha = 1.0
    multiplier = 1.0
    scale = alpha / lora_dim

    # Small shapes: orig module is nn.Linear(in_dim=32, out_dim=32) with bias.
    B, S, K, N = 2, 8, 32, 32

    key = jax.random.PRNGKey(0)
    k_x, k_w, k_b, k_down, k_up = jax.random.split(key, 5)

    x = jax.random.normal(k_x, (B, S, K), dtype=jnp.float32)
    w_orig = jax.random.normal(k_w, (K, N), dtype=jnp.float32) * 0.05
    b_orig = jax.random.normal(k_b, (N,), dtype=jnp.float32) * 0.05

    # lora_down: nn.init.kaiming_uniform_(a=1) -> U(-bound, bound), bound=sqrt(3/fan_in)
    bound = math.sqrt(3.0 / K)
    w_down = jax.random.uniform(k_down, (K, lora_dim), dtype=jnp.float32,
                                minval=-bound, maxval=bound)
    # The module inits lora_up to zeros; use NONZERO values in the self-test so
    # the LoRA branch and gain scaling are actually validated.
    w_up = jax.random.normal(k_up, (lora_dim, N), dtype=jnp.float32) * 0.1

    ref = _reference(x, w_orig, b_orig, w_down, w_up, multiplier, scale)

    # Weight prep runs once per config (outside the per-step path).
    p_fused_f32 = prepare_lora_linear(w_orig, b_orig, w_down, w_up, multiplier,
                                      scale, merge_lora=False,
                                      compute_dtype=jnp.float32)
    p_merged_f32 = prepare_lora_linear(w_orig, b_orig, w_down, w_up, multiplier,
                                       scale, merge_lora=True,
                                       compute_dtype=jnp.float32)
    p_fused_bf16 = prepare_lora_linear(w_orig, b_orig, w_down, w_up, multiplier,
                                       scale)   # defaults: unmerged, bf16

    out_fused = lora_linear_forward(x, p_fused_f32)
    out_merged = lora_linear_forward(x, p_merged_f32)
    out_bf16 = lora_linear_forward(x, p_fused_bf16)
    jax.block_until_ready((out_fused, out_merged, out_bf16))

    assert out_fused.shape == (B, S, N)
    assert out_merged.shape == (B, S, N)
    assert jnp.allclose(out_fused, ref, atol=1e-4, rtol=1e-4), \
        "in-kernel LoRA path mismatch vs reference"
    assert jnp.allclose(out_merged, ref, atol=1e-4, rtol=1e-4), \
        "merged-weight path mismatch vs reference"
    assert jnp.allclose(out_bf16, ref, atol=3e-2, rtol=3e-2), \
        "bf16 compute path mismatch vs reference"

    # A second, deliberately awkward shape to exercise M / K / N padding
    # (non-multiples of 8 / 128).
    B2, S2, K2, N2 = 1, 13, 100, 200
    k2 = jax.random.PRNGKey(1)
    k_x2, k_w2, k_b2, k_d2, k_u2 = jax.random.split(k2, 5)
    x2 = jax.random.normal(k_x2, (B2, S2, K2), dtype=jnp.float32)
    w2 = jax.random.normal(k_w2, (K2, N2), dtype=jnp.float32) * 0.05
    b2 = jax.random.normal(k_b2, (N2,), dtype=jnp.float32) * 0.05
    wd2 = jax.random.uniform(k_d2, (K2, lora_dim), dtype=jnp.float32,
                             minval=-math.sqrt(3.0 / K2),
                             maxval=math.sqrt(3.0 / K2))
    wu2 = jax.random.normal(k_u2, (lora_dim, N2), dtype=jnp.float32) * 0.1

    ref2 = _reference(x2, w2, b2, wd2, wu2, multiplier, scale)
    p2_f32 = prepare_lora_linear(w2, b2, wd2, wu2, multiplier, scale,
                                 merge_lora=False, compute_dtype=jnp.float32)
    p2_bf16 = prepare_lora_linear(w2, b2, wd2, wu2, multiplier, scale)
    out2_f32 = lora_linear_forward(x2, p2_f32)
    out2_bf16 = lora_linear_forward(x2, p2_bf16)
    jax.block_until_ready((out2_f32, out2_bf16))
    assert out2_f32.shape == (B2, S2, N2)
    assert jnp.allclose(out2_f32, ref2, atol=1e-4, rtol=1e-4), \
        "padded-shape f32 path mismatch vs reference"
    assert jnp.allclose(out2_bf16, ref2, atol=3e-2, rtol=3e-2), \
        "padded-shape bf16 path mismatch vs reference"

    print("KERNEL_OK")
</pallas_src>

<mosaic_0001>
module attributes {stable_mosaic.version = 11 : i64} {
  func.func @_lora_linear_kernel(%arg0: i32, %arg1: i32, %arg2: i32, %arg3: memref<8x128xf32, #tpu.memory_space<vmem>>, %arg4: memref<128x128xf32, #tpu.memory_space<vmem>>, %arg5: memref<1x128xf32, #tpu.memory_space<vmem>>, %arg6: memref<8x4xf32, #tpu.memory_space<vmem>>, %arg7: memref<4x128xf32, #tpu.memory_space<vmem>>, %arg8: memref<8x128xf32, #tpu.memory_space<vmem>>, %arg9: memref<8x128xf32, #tpu.memory_space<vmem>>) attributes {dimension_semantics = [#tpu.dimension_semantics<parallel>, #tpu.dimension_semantics<parallel>, #tpu.dimension_semantics<arbitrary>], iteration_bounds = array<i64: 2, 1, 1>, scalar_prefetch = 0 : i64, scratch_operands = 1 : i64, tpu.core_type = #tpu.core_type<tc>, window_params = [{transform_indices = @transform_0, window_bounds = array<i64: 8, 128>}, {transform_indices = @transform_1, window_bounds = array<i64: 128, 128>}, {transform_indices = @transform_2, window_bounds = array<i64: 1, 128>}, {transform_indices = @transform_3, window_bounds = array<i64: 8, 4>}, {transform_indices = @transform_4, window_bounds = array<i64: 4, 128>}, {transform_indices = @transform_5, window_bounds = array<i64: 8, 128>}]} {
    %c0_i32 = arith.constant 0 : i32
    %0 = arith.cmpi eq, %arg2, %c0_i32 : i32
    %1 = arith.extui %0 : i1 to i32
    %c0_i32_0 = arith.constant 0 : i32
    %2 = arith.cmpi ne, %1, %c0_i32_0 : i32
    scf.if %2 {
      %c0_10 = arith.constant 0 : index
      %c0_11 = arith.constant 0 : index
      %12 = vector.load %arg5[%c0_10, %c0_11] : memref<1x128xf32, #tpu.memory_space<vmem>>, vector<1x128xf32>
      %13 = vector.shape_cast %12 : vector<1x128xf32> to vector<1x128xf32>
      %14 = vector.broadcast %13 : vector<1x128xf32> to vector<8x128xf32>
      %c0_12 = arith.constant 0 : index
      %c0_13 = arith.constant 0 : index
      %15 = vector.load %arg9[%c0_12, %c0_13] : memref<8x128xf32, #tpu.memory_space<vmem>>, vector<8x128xf32>
      tpu.vector_store %arg9[%c0_12, %c0_13], %14 {strides = array<i32>} : memref<8x128xf32, #tpu.memory_space<vmem>>, vector<8x128xf32>,
    } else {
    }
    %c0 = arith.constant 0 : index
    %c0_1 = arith.constant 0 : index
    %3 = vector.load %arg9[%c0, %c0_1] : memref<8x128xf32, #tpu.memory_space<vmem>>, vector<8x128xf32>
    %c0_2 = arith.constant 0 : index
    %c0_3 = arith.constant 0 : index
    %4 = vector.load %arg3[%c0_2, %c0_3] : memref<8x128xf32, #tpu.memory_space<vmem>>, vector<8x128xf32>
    %c0_4 = arith.constant 0 : index
    %c0_5 = arith.constant 0 : index
    %5 = vector.load %arg4[%c0_4, %c0_5] : memref<128x128xf32, #tpu.memory_space<vmem>>, vector<128x128xf32>
    %cst = arith.constant dense<0.000000e+00> : vector<8x128xf32>
    %6 = tpu.matmul %4, %5, %cst {dimension_numbers = #tpu.dot_dimension_numbers<[1], [0], [0], [1], [0, 0, 1, 1], [], []>} : vector<8x128xf32>, vector<128x128xf32>, vector<8x128xf32> -> vector<8x128xf32>
    %7 = arith.addf %3, %6 : vector<8x128xf32>
    %c0_6 = arith.constant 0 : index
    %c0_7 = arith.constant 0 : index
    %8 = vector.load %arg9[%c0_6, %c0_7] : memref<8x128xf32, #tpu.memory_space<vmem>>, vector<8x128xf32>
    tpu.vector_store %arg9[%c0_6, %c0_7], %7 {strides = array<i32>} : memref<8x128xf32, #tpu.memory_space<vmem>>, vector<8x128xf32>,
    %c0_i32_8 = arith.constant 0 : i32
    %9 = arith.cmpi eq, %arg2, %c0_i32_8 : i32
    %10 = arith.extui %9 : i1 to i32
    %c0_i32_9 = arith.constant 0 : i32
    %11 = arith.cmpi ne, %10, %c0_i32_9 : i32
    scf.if %11 {
      %c0_10 = arith.constant 0 : index
      %c0_11 = arith.constant 0 : index
      %12 = vector.load %arg9[%c0_10, %c0_11] : memref<8x128xf32, #tpu.memory_space<vmem>>, vector<8x128xf32>
      %c0_12 = arith.constant 0 : index
      %c0_13 = arith.constant 0 : index
      %13 = vector.load %arg6[%c0_12, %c0_13] : memref<8x4xf32, #tpu.memory_space<vmem>>, vector<8x4xf32>
      %c0_14 = arith.constant 0 : index
      %c0_15 = arith.constant 0 : index
      %14 = vector.load %arg7[%c0_14, %c0_15] : memref<4x128xf32, #tpu.memory_space<vmem>>, vector<4x128xf32>
      %15 = vector.extract_strided_slice %13 {offsets = [0, 0], sizes = [8, 1], strides = [1, 1]} : vector<8x4xf32> to vector<8x1xf32>
      %16 = vector.extract_strided_slice %14 {offsets = [0, 0], sizes = [1, 128], strides = [1, 1]} : vector<4x128xf32> to vector<1x128xf32>
      %17 = vector.broadcast %15 : vector<8x1xf32> to vector<8x128xf32>
      %18 = vector.broadcast %16 : vector<1x128xf32> to vector<8x128xf32>
      %19 = arith.mulf %17, %18 : vector<8x128xf32>
      %20 = arith.addf %12, %19 : vector<8x128xf32>
      %21 = vector.extract_strided_slice %13 {offsets = [0, 1], sizes = [8, 1], strides = [1, 1]} : vector<8x4xf32> to vector<8x1xf32>
      %22 = vector.extract_strided_slice %14 {offsets = [1, 0], sizes = [1, 128], strides = [1, 1]} : vector<4x128xf32> to vector<1x128xf32>
      %23 = vector.broadcast %21 : vector<8x1xf32> to vector<8x128xf32>
      %24 = vector.broadcast %22 : vector<1x128xf32> to vector<8x128xf32>
      %25 = arith.mulf %23, %24 : vector<8x128xf32>
      %26 = arith.addf %20, %25 : vector<8x128xf32>
      %27 = vector.extract_strided_slice %13 {offsets = [0, 2], sizes = [8, 1], strides = [1, 1]} : vector<8x4xf32> to vector<8x1xf32>
      %28 = vector.extract_strided_slice %14 {offsets = [2, 0], sizes = [1, 128], strides = [1, 1]} : vector<4x128xf32> to vector<1x128xf32>
      %29 = vector.broadcast %27 : vector<8x1xf32> to vector<8x128xf32>
      %30 = vector.broadcast %28 : vector<1x128xf32> to vector<8x128xf32>
      %31 = arith.mulf %29, %30 : vector<8x128xf32>
      %32 = arith.addf %26, %31 : vector<8x128xf32>
      %33 = vector.extract_strided_slice %13 {offsets = [0, 3], sizes = [8, 1], strides = [1, 1]} : vector<8x4xf32> to vector<8x1xf32>
      %34 = vector.extract_strided_slice %14 {offsets = [3, 0], sizes = [1, 128], strides = [1, 1]} : vector<4x128xf32> to vector<1x128xf32>
      %35 = vector.broadcast %33 : vector<8x1xf32> to vector<8x128xf32>
      %36 = vector.broadcast %34 : vector<1x128xf32> to vector<8x128xf32>
      %37 = arith.mulf %35, %36 : vector<8x128xf32>
      %38 = arith.addf %32, %37 : vector<8x128xf32>
      %c0_16 = arith.constant 0 : index
      %c0_17 = arith.constant 0 : index
      %39 = vector.load %arg8[%c0_16, %c0_17] : memref<8x128xf32, #tpu.memory_space<vmem>>, vector<8x128xf32>
      tpu.vector_store %arg8[%c0_16, %c0_17], %38 {strides = array<i32>} : memref<8x128xf32, #tpu.memory_space<vmem>>, vector<8x128xf32>,
    } else {
    }
    return
  }
  func.func @transform_0(%arg0: i32, %arg1: i32, %arg2: i32) -> (i32, i32) {
    %c0_i32 = arith.constant 0 : i32
    return %arg0, %arg2 : i32, i32
  }
  func.func @transform_1(%arg0: i32, %arg1: i32, %arg2: i32) -> (i32, i32) {
    %c0_i32 = arith.constant 0 : i32
    return %arg2, %arg1 : i32, i32
  }
  func.func @transform_2(%arg0: i32, %arg1: i32, %arg2: i32) -> (i32, i32) {
    %c0_i32 = arith.constant 0 : i32
    %c0_i32_0 = arith.constant 0 : i32
    return %c0_i32, %arg1 : i32, i32
  }
  func.func @transform_3(%arg0: i32, %arg1: i32, %arg2: i32) -> (i32, i32) {
    %c0_i32 = arith.constant 0 : i32
    %c0_i32_0 = arith.constant 0 : i32
    return %arg0, %c0_i32 : i32, i32
  }
  func.func @transform_4(%arg0: i32, %arg1: i32, %arg2: i32) -> (i32, i32) {
    %c0_i32 = arith.constant 0 : i32
    %c0_i32_0 = arith.constant 0 : i32
    return %c0_i32, %arg1 : i32, i32
  }
  func.func @transform_5(%arg0: i32, %arg1: i32, %arg2: i32) -> (i32, i32) {
    %c0_i32 = arith.constant 0 : i32
    return %arg0, %arg1 : i32, i32
  }
}

</mosaic_0001>

<llo_original>
// kernel: tpu_custom_call.1
$region0: #{tpu_custom_call.1}
  #allocation0 [shape = 'u32[]', space=smem, size = 0x4, offset = 0x4, fixed_abs, tag = 'smem constant byte address 0x4 - core index']
  #allocation1 [shape = 'u32[144,128]{1,0:T(1,128)}', space=vmem, size = 0x12000, scoped, tag = 'internal scratch']
  #allocation2 [shape = 'f32[8,128]{1,0:T(8,128)}', space=vmem, size = 0x1000, scoped, tag = 'scratch operand']
  %s0 = inlined_call_operand.vmem [shape: f32[16,128], index: 0, kind: input, shape index: {}]
  %s1 = inlined_call_operand.hbm [shape: f32[128,128], index: 1, kind: input, shape index: {}]
  %s2 = inlined_call_operand.vmem [shape: f32[1,128], index: 2, kind: input, shape index: {}]
  %s3 = inlined_call_operand.vmem [shape: f32[16,4], index: 3, kind: input, shape index: {}]
  %s4 = inlined_call_operand.vmem [shape: f32[4,128], index: 4, kind: input, shape index: {}]
  %s5 = inlined_call_operand.hbm [shape: f32[16,128], index: 5, kind: output, shape index: {}]
  %s6 = sld [smem:[#allocation0]]
  $region65: #{tpu_custom_call.1} parent=0
    _
  %s8 = ssub.s32 1, %s6
  %s9 = scalar_select 0, %s8, %s6
  $region1: #{tpu_custom_call.1} parent=0
    #allocation3 [shape = 'u8[65536]{0}', space=vmem, size = 0x10000, scoped, tag = 'input window, operand 1, single buffered']
    #allocation4 [shape = 's32[2]{0}', space=sflag, size = 0x8, scoped, tag = 'scoped memory for tpu_custom_call.1']
    #allocation5 [shape = 's32[2]{0}', space=sflag, size = 0x8, scoped, tag = 'scoped memory for tpu_custom_call.1']
    #allocation6 [shape = 'u8[8192]{0}', space=vmem, size = 0x2000, scoped, tag = 'output window, operand 0']
    %10 = vsyncpa [#allocation4], 0
    %11 = vsyncpa [#allocation5], 0
    %s12 = scalar_lea.sflag [#allocation5], 1
    %13 = vsyncpa %s12, 0
    loop: start=0, step=1, limit=4
    $region2: #{tpu_custom_call.1} parent=1 // loop_pre_header
      _
    $region3: #{tpu_custom_call.1} parent=1 // loop_header
      %s15 = sphi 0, %s19
      %p16 = scmp.ge.s32.totalorder %s15, 4
      %s22 = sphi 0, %s41
      %s23 = sphi 0, %s37
      %s24 = sphi 0, %s33
      %s25 = sphi 0, %s22
      %s26 = sphi 0, %s23
      %s27 = sphi 0, %s24
      %s28 = sphi 0, %s25
      %s29 = sphi 0, %s26
      %s30 = sphi 0, %s27
      %s46 = sphi 0, %s48
      %s49 = sphi 0, %s46
      %s50 = sphi 0, %s49
      %s66 = sphi 0, %s50
      %s74 = sphi 0, %s76
      %s77 = sphi 0, %s74
      %s78 = sphi 0, %s77
      %s94 = sphi 0, %s78
      %s100 = sphi 0, %s102
      %s103 = sphi 0, %s100
      %s104 = sphi 0, %s103
      %s120 = sphi 0, %s104
      %s126 = sphi 0, %s128
      %s129 = sphi 0, %s126
      %s130 = sphi 0, %s129
      %s146 = sphi 0, %s130
      %s152 = sphi 0, %s154
      %s155 = sphi 0, %s152
      %s156 = sphi 0, %s155
      %s172 = sphi 0, %s156
      %s180 = sphi 0, %s182
      %s183 = sphi 0, %s180
      %s184 = sphi 0, %s183
      %s200 = sphi 0, %s184
    $region4: #{tpu_custom_call.1} parent=1 // loop_header_branch
      %18 = sbr.rel (%p16) target = $region8
    $region5: #{tpu_custom_call.1} parent=1 // loop_body
      %s20 = ssub.s32 %s15, 1
      %s21 = ssub.s32 %s15, 2
      %s31 = sadd.s32 1, %s24
      %p32 = scmp.ge.s32.totalorder %s31, 1
      %s33 = scalar_select %p32, 0, %s31
      %s34 = sadd.s32 1, %s23
      %s35 = scalar_select %p32, %s34, %s23
      %p36 = scmp.ge.s32.totalorder %s35, 1
      %s37 = scalar_select %p36, 0, %s35
      %s38 = sadd.s32 1, %s22
      %s39 = scalar_select %p36, %s38, %s22
      %p40 = scmp.ge.s32.totalorder %s39, 2
      %s41 = scalar_select %p40, 0, %s39
      %s42 = ssub.s32 %s22, %s41
      %s43 = ssub.s32 %s24, %s33
      %s44 = sor.u32 %s42, %s43
      %p45 = scmp.eq.s32.totalorder %s44, 0
      %s47 = sadd.s32 %s46, 1
      %s48 = scalar_select %p45, %s46, %s47
      %p51 = pneg %p45
      %p52 = scmp.eq.s32.totalorder %s15, 1
      %p53 = por %p51, %p52
      %p54 = scmp.ne.s32.totalorder %s46, %s49
      %p55 = scmp.eq.s32.totalorder %s15, 0
      %p56 = por %p54, %p55
      %p57 = scmp.ne.s32.totalorder %s46, %s49
      %p58 = scmp.eq.s32.totalorder %s20, 1
      %p59 = por %p57, %p58
      %p60 = scmp.ne.s32.totalorder %s49, %s50
      %p61 = scmp.eq.s32.totalorder %s20, 0
      %p62 = por %p60, %p61
      %p63 = scmp.ne.s32.totalorder %s49, %s50
      %p64 = scmp.eq.s32.totalorder %s21, 1
      %p65 = por %p63, %p64
      %p67 = scmp.ne.s32.totalorder %s50, %s66
      %p68 = scmp.eq.s32.totalorder %s21, 0
      %p69 = por %p67, %p68
      %s70 = ssub.s32 %s24, %s33
      %s71 = ssub.s32 %s23, %s37
      %s72 = sor.u32 %s70, %s71
      %p73 = scmp.eq.s32.totalorder %s72, 0
      %s75 = sadd.s32 %s74, 1
      %s76 = scalar_select %p73, %s74, %s75
      %p79 = pneg %p73
      %p80 = scmp.eq.s32.totalorder %s15, 1
      %p81 = por %p79, %p80
      %p82 = scmp.ne.s32.totalorder %s74, %s77
      %p83 = scmp.eq.s32.totalorder %s15, 0
      %p84 = por %p82, %p83
      %p85 = scmp.ne.s32.totalorder %s74, %s77
      %p86 = scmp.eq.s32.totalorder %s20, 1
      %p87 = por %p85, %p86
      %p88 = scmp.ne.s32.totalorder %s77, %s78
      %p89 = scmp.eq.s32.totalorder %s20, 0
      %p90 = por %p88, %p89
      %p91 = scmp.ne.s32.totalorder %s77, %s78
      %p92 = scmp.eq.s32.totalorder %s21, 1
      %p93 = por %p91, %p92
      %p95 = scmp.ne.s32.totalorder %s78, %s94
      %p96 = scmp.eq.s32.totalorder %s21, 0
      %p97 = por %p95, %p96
      %s98 = ssub.s32 %s23, %s37
      %p99 = scmp.eq.s32.totalorder %s98, 0
      %s101 = sadd.s32 %s100, 1
      %s102 = scalar_select %p99, %s100, %s101
      %p105 = pneg %p99
      %p106 = scmp.eq.s32.totalorder %s15, 1
      %p107 = por %p105, %p106
      %p108 = scmp.ne.s32.totalorder %s100, %s103
      %p109 = scmp.eq.s32.totalorder %s15, 0
      %p110 = por %p108, %p109
      %p111 = scmp.ne.s32.totalorder %s100, %s103
      %p112 = scmp.eq.s32.totalorder %s20, 1
      %p113 = por %p111, %p112
      %p114 = scmp.ne.s32.totalorder %s103, %s104
      %p115 = scmp.eq.s32.totalorder %s20, 0
      %p116 = por %p114, %p115
      %p117 = scmp.ne.s32.totalorder %s103, %s104
      %p118 = scmp.eq.s32.totalorder %s21, 1
      %p119 = por %p117, %p118
      %p121 = scmp.ne.s32.totalorder %s104, %s120
      %p122 = scmp.eq.s32.totalorder %s21, 0
      %p123 = por %p121, %p122
      %s124 = ssub.s32 %s22, %s41
      %p125 = scmp.eq.s32.totalorder %s124, 0
      %s127 = sadd.s32 %s126, 1
      %s128 = scalar_select %p125, %s126, %s127
      %p131 = pneg %p125
      %p132 = scmp.eq.s32.totalorder %s15, 1
      %p133 = por %p131, %p132
      %p134 = scmp.ne.s32.totalorder %s126, %s129
      %p135 = scmp.eq.s32.totalorder %s15, 0
      %p136 = por %p134, %p135
      %p137 = scmp.ne.s32.totalorder %s126, %s129
      %p138 = scmp.eq.s32.totalorder %s20, 1
      %p139 = por %p137, %p138
      %p140 = scmp.ne.s32.totalorder %s129, %s130
      %p141 = scmp.eq.s32.totalorder %s20, 0
      %p142 = por %p140, %p141
      %p143 = scmp.ne.s32.totalorder %s129, %s130
      %p144 = scmp.eq.s32.totalorder %s21, 1
      %p145 = por %p143, %p144
      %p147 = scmp.ne.s32.totalorder %s130, %s146
      %p148 = scmp.eq.s32.totalorder %s21, 0
      %p149 = por %p147, %p148
      %s150 = ssub.s32 %s23, %s37
      %p151 = scmp.eq.s32.totalorder %s150, 0
      %s153 = sadd.s32 %s152, 1
      %s154 = scalar_select %p151, %s152, %s153
      %p157 = pneg %p151
      %p158 = scmp.eq.s32.totalorder %s15, 1
      %p159 = por %p157, %p158
      %p160 = scmp.ne.s32.totalorder %s152, %s155
      %p161 = scmp.eq.s32.totalorder %s15, 0
      %p162 = por %p160, %p161
      %p163 = scmp.ne.s32.totalorder %s152, %s155
      %p164 = scmp.eq.s32.totalorder %s20, 1
      %p165 = por %p163, %p164
      %p166 = scmp.ne.s32.totalorder %s155, %s156
      %p167 = scmp.eq.s32.totalorder %s20, 0
      %p168 = por %p166, %p167
      %p169 = scmp.ne.s32.totalorder %s155, %s156
      %p170 = scmp.eq.s32.totalorder %s21, 1
      %p171 = por %p169, %p170
      %p173 = scmp.ne.s32.totalorder %s156, %s172
      %p174 = scmp.eq.s32.totalorder %s21, 0
      %p175 = por %p173, %p174
      %s176 = ssub.s32 %s22, %s41
      %s177 = ssub.s32 %s23, %s37
      %s178 = sor.u32 %s176, %s177
      %p179 = scmp.eq.s32.totalorder %s178, 0
      %s181 = sadd.s32 %s180, 1
      %s182 = scalar_select %p179, %s180, %s181
      %p185 = pneg %p179
      %p186 = scmp.eq.s32.totalorder %s15, 1
      %p187 = por %p185, %p186
      %p188 = scmp.ne.s32.totalorder %s180, %s183
      %p189 = scmp.eq.s32.totalorder %s15, 0
      %p190 = por %p188, %p189
      %p191 = scmp.ne.s32.totalorder %s180, %s183
      %p192 = scmp.eq.s32.totalorder %s20, 1
      %p193 = por %p191, %p192
      %p194 = scmp.ne.s32.totalorder %s183, %s184
      %p195 = scmp.eq.s32.totalorder %s20, 0
      %p196 = por %p194, %p195
      %p197 = scmp.ne.s32.totalorder %s183, %s184
      %p198 = scmp.eq.s32.totalorder %s21, 1
      %p199 = por %p197, %p198
      %p201 = scmp.ne.s32.totalorder %s184, %s200
      %p202 = scmp.eq.s32.totalorder %s21, 0
      %p203 = por %p201, %p202
      %p204 = scmp.le.s32.totalorder 1, %s15
      %p205 = scmp.lt.s32.totalorder %s15, 3
      %p206 = pnand %p204, %p205
      %p207 = pneg %p206
      // Predicated region
      $region9: #{tpu_custom_call.1} parent=5 // pred_check
        _
      $region10: #{tpu_custom_call.1} parent=5 // pred_check_branch
        %209 = sbr.rel (%p206) target = $region12
      $region11: #{tpu_custom_call.1} parent=5 // pred_region
        %s210 = ssub.s32 %s15, 1
        // Predicated region
        $region13: #{tpu_custom_call.1} parent=11 // pred_check
          %p211 = pneg %p90
        $region14: #{tpu_custom_call.1} parent=11 // pred_check_branch
          %213 = sbr.rel (%p211) target = $region16
        $region15: #{tpu_custom_call.1} parent=11 // pred_region
          %s214 = smul.u32 16, %s27
          %s216 = ssub.s32 2048, 2048
          %217 = vsyncadd [#allocation4], %s216
          %s218 = sadd.s32 %s26, %s214
          %s219 = smul.addr %s218, 128
          %s220 = scalar_lea.hbm %s1, %s219
          %s221 = sshll.u32 [#allocation3], 4
          %s222 = int_to_ptr.vmem [resolvable:$true] %s221
          %227 = dma.hbm_to_vmem [thread:$0]  %s220, 2048, %s222, [#allocation4], 128, 128, 8
        $region16: #{tpu_custom_call.1} parent=11 // pred_fallthru
          _
        // Predicated region
        $region17: #{tpu_custom_call.1} parent=11 // pred_check
          %p228 = pneg %p116
        $region18: #{tpu_custom_call.1} parent=11 // pred_check_branch
          %230 = sbr.rel (%p228) target = $region20
        $region19: #{tpu_custom_call.1} parent=11 // pred_region
          %p231 = scmp.lt.s32.totalorder %s26, 0
          %s232 = scalar_select %p231, %s26, 0
          %s233 = scalar_lea.vmem %s2, %s232
        $region20: #{tpu_custom_call.1} parent=11 // pred_fallthru
          _
        // Predicated region
        $region21: #{tpu_custom_call.1} parent=11 // pred_check
          %p234 = pneg %p168
        $region22: #{tpu_custom_call.1} parent=11 // pred_check_branch
          %236 = sbr.rel (%p234) target = $region24
        $region23: #{tpu_custom_call.1} parent=11 // pred_region
          %p237 = scmp.lt.s32.totalorder %s26, 0
          %s238 = scalar_select %p237, %s26, 0
          %s239 = smul.addr %s238, 4
          %s240 = scalar_lea.vmem %s4, %s239
        $region24: #{tpu_custom_call.1} parent=11 // pred_fallthru
          _
      $region12: #{tpu_custom_call.1} parent=5 // pred_fallthru
        _
      %p241 = scmp.lt.s32.totalorder %s15, 2
      // Predicated region
      $region25: #{tpu_custom_call.1} parent=5 // pred_check
        %p242 = pneg %p241
      $region26: #{tpu_custom_call.1} parent=5 // pred_check_branch
        %244 = sbr.rel (%p242) target = $region28
      $region27: #{tpu_custom_call.1} parent=5 // pred_region
        // Predicated region
        $region29: #{tpu_custom_call.1} parent=27 // pred_check
          %p245 = pneg %p56
        $region30: #{tpu_custom_call.1} parent=27 // pred_check_branch
          %247 = sbr.rel (%p245) target = $region32
        $region31: #{tpu_custom_call.1} parent=27 // pred_region
          %p248 = scmp.lt.s32.totalorder %s22, 1
          %s249 = scalar_select %p248, %s22, 1
          %p250 = scmp.lt.s32.totalorder %s24, 0
          %s251 = scalar_select %p250, %s24, 0
          %s252 = sadd.s32 %s251, %s249
          %s253 = smul.addr %s252, 8
          %s254 = scalar_lea.vmem %s0, %s253
        $region32: #{tpu_custom_call.1} parent=27 // pred_fallthru
          _
        // Predicated region
        $region33: #{tpu_custom_call.1} parent=27 // pred_check
          %p255 = pneg %p136
        $region34: #{tpu_custom_call.1} parent=27 // pred_check_branch
          %257 = sbr.rel (%p255) target = $region36
        $region35: #{tpu_custom_call.1} parent=27 // pred_region
          %p258 = scmp.lt.s32.totalorder %s22, 1
          %s259 = scalar_select %p258, %s22, 1
          %s260 = smul.addr %s259, 8
          %s261 = scalar_lea.vmem %s3, %s260
        $region36: #{tpu_custom_call.1} parent=27 // pred_fallthru
          _
      $region28: #{tpu_custom_call.1} parent=5 // pred_fallthru
        _
      %p262 = scmp.le.s32.totalorder 1, %s15
      %p263 = scmp.lt.s32.totalorder %s15, 3
      %p264 = pnand %p262, %p263
      %p265 = pneg %p264
      // Predicated region
      $region37: #{tpu_custom_call.1} parent=5 // pred_check
        _
      $region38: #{tpu_custom_call.1} parent=5 // pred_check_branch
        %267 = sbr.rel (%p264) target = $region40
      $region39: #{tpu_custom_call.1} parent=5 // pred_region
        %s268 = ssub.s32 %s15, 1
        // Predicated region
        $region41: #{tpu_custom_call.1} parent=39 // pred_check
          %p269 = pneg %p90
        $region42: #{tpu_custom_call.1} parent=39 // pred_check_branch
          %271 = sbr.rel (%p269) target = $region44
        $region43: #{tpu_custom_call.1} parent=39 // pred_region
          %272 = dma.done [#allocation4], 2048
        $region44: #{tpu_custom_call.1} parent=39 // pred_fallthru
          _
        %p273 = scmp.lt.s32.totalorder %s25, 1
        %s274 = scalar_select %p273, %s25, 1
        %p275 = scmp.lt.s32.totalorder %s27, 0
        %s276 = scalar_select %p275, %s27, 0
        %s277 = sadd.s32 %s276, %s274
        %s278 = smul.addr %s277, 8
        %s279 = scalar_lea.vmem %s0, %s278
        %p280 = pneg %p62
        %p281 = pneg %p59
        %p282 = pneg %p90
        %p283 = pneg %p87
        %p284 = scmp.lt.s32.totalorder %s26, 0
        %s285 = scalar_select %p284, %s26, 0
        %s286 = scalar_lea.vmem %s2, %s285
        %p287 = pneg %p116
        %p288 = pneg %p113
        %p289 = scmp.lt.s32.totalorder %s25, 1
        %s290 = scalar_select %p289, %s25, 1
        %s291 = smul.addr %s290, 8
        %s292 = scalar_lea.vmem %s3, %s291
        %p293 = pneg %p142
        %p294 = pneg %p139
        %p295 = scmp.lt.s32.totalorder %s26, 0
        %s296 = scalar_select %p295, %s26, 0
        %s297 = smul.addr %s296, 4
        %s298 = scalar_lea.vmem %s4, %s297
        %p299 = pneg %p168
        %p300 = pneg %p165
        %p301 = pneg %p196
        %p302 = pneg %p193
        %s303 = sand.u32 %s183, 1
        %s304 = scalar_lea.sflag [#allocation5], %s303
        %s305 = sand.u32 %s183, 1
        %s306 = smul.addr %s305, 8
        %s307 = scalar_lea.vmem [#allocation6], %s306
        %p308 = scmp.lt.s32.totalorder %s25, 1
        %s309 = scalar_select %p308, %s25, 1
        %p310 = scmp.lt.s32.totalorder %s27, 0
        %s311 = scalar_select %p310, %s27, 0
        %s312 = sadd.s32 %s311, %s309
        %s313 = smul.addr %s312, 8
        %s314 = scalar_lea.vmem %s0, %s313
        %s315 = smul.u32 16, %s27
        %p316 = scmp.lt.s32.totalorder %s26, 0
        %s317 = scalar_select %p316, %s26, 0
        %s318 = scalar_lea.vmem %s2, %s317
        %p319 = scmp.lt.s32.totalorder %s25, 1
        %s320 = scalar_select %p319, %s25, 1
        %s321 = smul.addr %s320, 8
        %s322 = scalar_lea.vmem %s3, %s321
        %p323 = scmp.lt.s32.totalorder %s26, 0
        %s324 = scalar_select %p323, %s26, 0
        %s325 = smul.addr %s324, 4
        %s326 = scalar_lea.vmem %s4, %s325
        %p327 = scmp.eq.s32.totalorder %s27, 0
        // Predicated region
        $region45: #{tpu_custom_call.1} parent=39 // pred_check
          %p328 = pneg %p327
        $region46: #{tpu_custom_call.1} parent=39 // pred_check_branch
          %330 = sbr.rel (%p328) target = $region48
        $region47: #{tpu_custom_call.1} parent=39 // pred_region
          %v331 = vld [vmem:[%s318] sm:$0x1]
          %v333 = vlaneseq
          %v334 = vshrl.u32 %v333, 7
          %v335 = vsub.s32 0, %v334
          %v336 = vrot.slane %v331, %v335
          %338 = vst [vmem:[#allocation2] sm:$0xff] %v336
        $region48: #{tpu_custom_call.1} parent=39 // pred_fallthru
          _
        %v339 = vld [vmem:[#allocation2] sm:$0xff]
        %v340 = vld [vmem:[%s314] sm:$0xff]
        %v341 = vld [vmem:[#allocation3] sm:$0xff]
        %v342 = vld [vmem:[#allocation3 + $0x8] sm:$0xff]
        %v343 = vld [vmem:[#allocation3 + $0x10] sm:$0xff]
        %v344 = vld [vmem:[#allocation3 + $0x18] sm:$0xff]
        %v345 = vld [vmem:[#allocation3 + $0x20] sm:$0xff]
        %v346 = vld [vmem:[#allocation3 + $0x28] sm:$0xff]
        %v347 = vld [vmem:[#allocation3 + $0x30] sm:$0xff]
        %v348 = vld [vmem:[#allocation3 + $0x38] sm:$0xff]
        %v349 = vld [vmem:[#allocation3 + $0x40] sm:$0xff]
        %v350 = vld [vmem:[#allocation3 + $0x48] sm:$0xff]
        %v351 = vld [vmem:[#allocation3 + $0x50] sm:$0xff]
        %v352 = vld [vmem:[#allocation3 + $0x58] sm:$0xff]
        %v353 = vld [vmem:[#allocation3 + $0x60] sm:$0xff]
        %v354 = vld [vmem:[#allocation3 + $0x68] sm:$0xff]
        %v355 = vld [vmem:[#allocation3 + $0x70] sm:$0xff]
        %v356 = vld [vmem:[#allocation3 + $0x78] sm:$0xff]
        %357 = vmatprep.subr.mxu0 0.0
        %358 = vmatpush1.msra.mxu0 %v356
        %359 = vmatprep.subr.mxu0 0.0
        %360 = vmatpush1.msra.mxu0 %v355
        %361 = vmatprep.subr.mxu0 0.0
        %362 = vmatpush1.msra.mxu0 %v354
        %363 = vmatprep.subr.mxu0 0.0
        %364 = vmatpush1.msra.mxu0 %v353
        %365 = vmatprep.subr.mxu0 0.0
        %366 = vmatpush1.msra.mxu0 %v352
        %367 = vmatprep.subr.mxu0 0.0
        %368 = vmatpush1.msra.mxu0 %v351
        %369 = vmatprep.subr.mxu0 0.0
        %370 = vmatpush1.msra.mxu0 %v350
        %371 = vmatprep.subr.mxu0 0.0
        %372 = vmatpush1.msra.mxu0 %v349
        %373 = vmatprep.subr.mxu0 0.0
        %374 = vmatpush1.msra.mxu0 %v348
        %375 = vmatprep.subr.mxu0 0.0
        %376 = vmatpush1.msra.mxu0 %v347
        %377 = vmatprep.subr.mxu0 0.0
        %378 = vmatpush1.msra.mxu0 %v346
        %379 = vmatprep.subr.mxu0 0.0
        %380 = vmatpush1.msra.mxu0 %v345
        %381 = vmatprep.subr.mxu0 0.0
        %382 = vmatpush1.msra.mxu0 %v344
        %383 = vmatprep.subr.mxu0 0.0
        %384 = vmatpush1.msra.mxu0 %v343
        %385 = vmatprep.subr.mxu0 0.0
        %386 = vmatpush1.msra.mxu0 %v342
        %387 = vmatprep.subr.mxu0 0.0
        %388 = vmatpush1.msra.mxu0 %v341
        %389 = vmatprep.subr.mxu0 0.0
        %390 = vmatpush2.msra.mxu0 0.0
        %391 = vmatprep.subr.mxu0 0.0
        %392 = vmatpush2.msra.mxu0 0.0
        %393 = vmatprep.subr.mxu0 0.0
        %394 = vmatpush2.msra.mxu0 0.0
        %395 = vmatprep.subr.mxu0 0.0
        %396 = vmatpush2.msra.mxu0 0.0
        %397 = vmatprep.subr.mxu0 0.0
        %398 = vmatpush2.msra.mxu0 0.0
        %399 = vmatprep.subr.mxu0 0.0
        %400 = vmatpush2.msra.mxu0 0.0
        %401 = vmatprep.subr.mxu0 0.0
        %402 = vmatpush2.msra.mxu0 0.0
        %403 = vmatprep.subr.mxu0 0.0
        %404 = vmatpush2.msra.mxu0 0.0
        %405 = vmatprep.subr.mxu0 0.0
        %406 = vmatpush2.msra.mxu0 0.0
        %407 = vmatprep.subr.mxu0 0.0
        %408 = vmatpush2.msra.mxu0 0.0
        %409 = vmatprep.subr.mxu0 0.0
        %410 = vmatpush2.msra.mxu0 0.0
        %411 = vmatprep.subr.mxu0 0.0
        %412 = vmatpush2.msra.mxu0 0.0
        %413 = vmatprep.subr.mxu0 0.0
        %414 = vmatpush2.msra.mxu0 0.0
        %415 = vmatprep.subr.mxu0 0.0
        %416 = vmatpush2.msra.mxu0 0.0
        %417 = vmatprep.subr.mxu0 0.0
        %418 = vmatpush2.msra.mxu0 0.0
        %419 = vmatprep.subr.mxu0 0.0
        %420 = vmatpush2.msra.mxu0 0.0
        %421 = vmatprep.mubr.f32.mxu0 0.0
        %422 = vmatmul.mubr.f32.gmra.mxu0 %v340
        %v423 = vpop.f32.mrf.mxu0
        %v424 = vadd.f32 0.0, %v423
        %v425 = vpop.f32.mrf.mxu0
        %426 = vdwg.mxu0
        %v427 = vadd.f32 %v339, %v424
        %428 = vst [vmem:[#allocation2] sm:$0xff] %v427
        // Predicated region
        $region49: #{tpu_custom_call.1} parent=39 // pred_check
          %p429 = pneg %p327
        $region50: #{tpu_custom_call.1} parent=39 // pred_check_branch
          %431 = sbr.rel (%p429) target = $region52
        $region51: #{tpu_custom_call.1} parent=39 // pred_region
          %v432 = vld [vmem:[#allocation2] sm:$0xff]
          %v433 = vld [vmem:[%s322] sm:$0xff]
          %v434 = vld [vmem:[%s326] sm:$0xf]
          %436 = vset.pattern.permute.xlu0 0
          %437 = vperm.xlu0 %436, %v433
          %v438 = vpop.permute.xlu0 %437
          %v440 = vlaneseq
          %v441 = vshrl.u32 %v440, 7
          %v442 = vsub.s32 0, %v441
          %v443 = vrot.slane %v434, %v442
          %v444 = vmul.f32 %v438, %v443
          %v445 = vadd.f32 %v432, %v444
          %446 = vset.pattern.permute.xlu0 1
          %447 = vperm.xlu0 %446, %v433
          %v448 = vpop.permute.xlu0 %447
          %v450 = vlaneseq
          %v451 = vshrl.u32 %v450, 7
          %v452 = vsub.s32 1, %v451
          %v453 = vrot.slane %v434, %v452
          %v454 = vmul.f32 %v448, %v453
          %v455 = vadd.f32 %v445, %v454
          %456 = vset.pattern.permute.xlu0 2
          %457 = vperm.xlu0 %456, %v433
          %v458 = vpop.permute.xlu0 %457
          %v460 = vlaneseq
          %v461 = vshrl.u32 %v460, 7
          %v462 = vsub.s32 2, %v461
          %v463 = vrot.slane %v434, %v462
          %v464 = vmul.f32 %v458, %v463
          %v465 = vadd.f32 %v455, %v464
          %466 = vset.pattern.permute.xlu0 3
          %467 = vperm.xlu0 %466, %v433
          %v468 = vpop.permute.xlu0 %467
          %v470 = vlaneseq
          %v471 = vshrl.u32 %v470, 7
          %v472 = vsub.s32 3, %v471
          %v473 = vrot.slane %v434, %v472
          %v474 = vmul.f32 %v468, %v473
          %v475 = vadd.f32 %v465, %v474
          %476 = vst [vmem:[%s307] sm:$0xff] %v475
        $region52: #{tpu_custom_call.1} parent=39 // pred_fallthru
          _
        %s477 = sand.u32 %s183, 1
        %s478 = scalar_lea.sflag [#allocation5], %s477
        %s479 = sand.u32 %s183, 1
        %s480 = smul.addr %s479, 8
        %s481 = scalar_lea.vmem [#allocation6], %s480
        // Predicated region
        $region53: #{tpu_custom_call.1} parent=39 // pred_check
          %p482 = pneg %p193
        $region54: #{tpu_custom_call.1} parent=39 // pred_check_branch
          %484 = sbr.rel (%p482) target = $region56
        $region55: #{tpu_custom_call.1} parent=39 // pred_region
          %s486 = ssub.s32 128, 128
          %487 = vsyncadd %s478, %s486
          %s488 = sadd.s32 %s26, %s25
          %s489 = smul.addr %s488, 128
          %s490 = scalar_lea.hbm %s5, %s489
          %s492 = sshll.u32 %s481, 4
          %s493 = int_to_ptr.vmem [resolvable:$true] %s492
          %495 = dma.vmem_to_hbm [thread:$0]  %s493, 128, %s490, %s478
        $region56: #{tpu_custom_call.1} parent=39 // pred_fallthru
          _
      $region40: #{tpu_custom_call.1} parent=5 // pred_fallthru
        _
      %p496 = scmp.le.s32.totalorder 2, %s15
      // Predicated region
      $region57: #{tpu_custom_call.1} parent=5 // pred_check
        %p497 = pneg %p496
      $region58: #{tpu_custom_call.1} parent=5 // pred_check_branch
        %499 = sbr.rel (%p497) target = $region60
      $region59: #{tpu_custom_call.1} parent=5 // pred_region
        %s500 = ssub.s32 %s15, 2
        // Predicated region
        $region61: #{tpu_custom_call.1} parent=59 // pred_check
          %p501 = pneg %p199
        $region62: #{tpu_custom_call.1} parent=59 // pred_check_branch
          %503 = sbr.rel (%p501) target = $region64
        $region63: #{tpu_custom_call.1} parent=59 // pred_region
          %s504 = sand.u32 %s184, 1
          %s505 = scalar_lea.sflag [#allocation5], %s504
          %s506 = sand.u32 %s184, 1
          %s507 = smul.addr %s506, 8
          %s508 = scalar_lea.vmem [#allocation6], %s507
          %509 = dma.done %s505, 128
        $region64: #{tpu_custom_call.1} parent=59 // pred_fallthru
          _
      $region60: #{tpu_custom_call.1} parent=5 // pred_fallthru
        _
    $region6: #{tpu_custom_call.1} parent=1 // loop_footer
      %s19 = sadd.s32 1, %s15
    $region7: #{tpu_custom_call.1} parent=1 // loop_footer_branch
      %14 = sbr.rel target = $region3
    $region8: #{tpu_custom_call.1} parent=1 // loop_exit
      _
    %510 = vsyncpa [#allocation4], 1
    %s511 = scalar_lea.sflag [#allocation4], 1
    %512 = vsyncpa %s511, 1
    %513 = vsyncpa [#allocation5], 1
    %s514 = scalar_lea.sflag [#allocation5], 1
    %515 = vsyncpa %s514, 1

</llo_original>
